<compile_context>
chip_gen: v7x
topology: tpu7x:2x2x1
jax: 0.10.0
libtpu: 0.0.40
codegen_flags: <defaults>
</compile_context>

<pallas_src>
import jax
import jax.numpy as jnp
from jax.experimental import pallas as pl
from jax.experimental.pallas import tpu as pltpu


# ----------------------------- kernel ---------------------------------------

def ms_mlp_kernel(x_ref, w1_ref, b1_ref, w2_ref, b2_ref, o_ref):
    # x_ref: (C, tn) tile -- channels on sublanes, spatial N on lanes (lane-dense IO).
    # Full-precision MXU passes only when operands are f32 (bf16 path uses default).
    prec = jax.lax.Precision.HIGHEST if w1_ref.dtype == jnp.float32 else None

    # Input spike: floor(clamp(x,0,4)+0.5) -> exact small integers 0..4.
    # The trailing /4 of Multispike is folded into W1 (exact power-of-two scale).
    xs = jnp.floor(jnp.clip(x_ref[...].astype(jnp.float32), 0.0, 4.0) + 0.5)
    xs = xs.astype(w1_ref.dtype)                       # lossless cast (small ints)

    h = jnp.dot(w1_ref[...], xs,                       # fc1_conv, BN1 scale + /4 folded in
                preferred_element_type=jnp.float32, precision=prec)
    h = h + b1_ref[...]                                # BN1 shift + hidden spike's +0.5

    # Hidden spike: floor(clamp(v,0,4)+0.5) == clamp(floor(v+0.5),0,4); the +0.5
    # is already inside b1 and the /4 is folded into W2.
    hs = jnp.clip(jnp.floor(h), 0.0, 4.0).astype(w2_ref.dtype)   # exact ints 0..4

    y = jnp.dot(w2_ref[...], hs,                       # fc2_conv, BN2 scale + /4 folded in
                preferred_element_type=jnp.float32, precision=prec)
    o_ref[...] = (y + b2_ref[...]).astype(o_ref.dtype)            # BN2 shift


# ----------------------------- tiling ---------------------------------------

def _round_up(a, b):
    return (a + b - 1) // b * b


def _choose_tiling(TB, N, C, H, C_out, x_bytes, o_bytes, w_bytes):
    """Pick the lane tile tn (multiple of 128), padded spatial size Np, and a
    VMEM-need estimate. tn is sized against the live intermediates ((H,tn) f32 h
    and (H,tn) compute-dtype spikes), not just the DMA'd tiles."""
    n128 = _round_up(max(N, 1), 128)
    per_col = (2 * C * x_bytes          # double-buffered input tile
               + 2 * C_out * o_bytes    # double-buffered output tile
               + H * (4 + w_bytes))     # f32 h + compute-dtype hs intermediates
    fixed = H * (C + C_out) * w_bytes + (H + C_out) * 128 * 4     # weights + padded biases
    budget = 24 << 20                   # fits v7x's 64 MiB/TC with headroom
    cap = 128
    for t in (1024, 512, 256, 128):
        if fixed + t * per_col <= budget:
            cap = t
            break
    # Pad N up to a cap-sized tile instead of shrinking the tile to a divisor of
    # N (padded columns are independent under a k=1 conv and are sliced off).
    tn = n128 if n128 <= cap else cap
    # Guarantee >= 2 grid steps along a parallel axis (v7x has 2 TensorCores).
    if TB == 1 and n128 <= tn and tn > 128:
        tn = max(128, (tn // 2) // 128 * 128)
    Np = _round_up(n128, tn)
    need = fixed + tn * per_col
    return tn, Np, need


# ----------------------------- wrapper ---------------------------------------

def ms_mlp_forward(x, w1, bn1, w2, bn2, *, compute_dtype=jnp.bfloat16,
                   out_dtype=None, eps=1e-5):
    """x: (T,B,C,N). w1: (H,C), w2: (C_out,H). bn1/bn2: dicts gamma/beta/mean/var
    (eval-mode BN). compute_dtype: MXU operand dtype (bf16 default). out_dtype:
    defaults to x.dtype -- feed bf16 x for bf16-in/bf16-out (halves HBM bytes)."""
    T, B, C, N = x.shape
    H = w1.shape[0]
    C_out = w2.shape[0]
    out_dtype = x.dtype if out_dtype is None else out_dtype

    # Fold eval-mode BN and the Multispike constants into weights/biases.
    s1 = bn1["gamma"] / jnp.sqrt(bn1["var"] + eps)                 # (H,)
    s2 = bn2["gamma"] / jnp.sqrt(bn2["var"] + eps)                 # (C_out,)
    w1f = (w1 * (0.25 * s1)[:, None]).astype(compute_dtype)        # BN1 scale + input-spike /4
    w2f = (w2 * (0.25 * s2)[:, None]).astype(compute_dtype)        # BN2 scale + hidden-spike /4
    b1 = (bn1["beta"] - bn1["mean"] * s1 + 0.5).reshape(H, 1).astype(jnp.float32)
    b2 = (bn2["beta"] - bn2["mean"] * s2).reshape(C_out, 1).astype(jnp.float32)

    # Native layout: (T,B,C,N) -> (T*B, C, N) is a free reshape (N stays on lanes).
    TB = T * B
    xm = x.reshape(TB, C, N)

    x_bytes = jnp.dtype(x.dtype).itemsize
    o_bytes = jnp.dtype(out_dtype).itemsize
    w_bytes = jnp.dtype(compute_dtype).itemsize
    tn, Np, need_bytes = _choose_tiling(TB, N, C, H, C_out, x_bytes, o_bytes, w_bytes)
    if Np != N:
        # k=1 conv is per-position; zero-padded columns never pollute real ones.
        xm = jnp.pad(xm, ((0, 0), (0, 0), (0, Np - N)))

    grid = (TB, Np // tn)
    flops = 2 * TB * Np * H * (C + C_out)
    bytes_accessed = (TB * Np * (C * x_bytes + C_out * o_bytes)
                      + H * (C + C_out) * w_bytes + (H + C_out) * 4)

    out = pl.pallas_call(
        ms_mlp_kernel,
        out_shape=jax.ShapeDtypeStruct((TB, C_out, Np), out_dtype),
        grid_spec=pltpu.PrefetchScalarGridSpec(
            num_scalar_prefetch=0,
            grid=grid,
            in_specs=[
                pl.BlockSpec((None, C, tn), lambda i, j: (i, 0, j)),   # x tile (C, tn)
                pl.BlockSpec((H, C), lambda i, j: (0, 0)),             # folded W1 (resident)
                pl.BlockSpec((H, 1), lambda i, j: (0, 0)),             # folded b1
                pl.BlockSpec((C_out, H), lambda i, j: (0, 0)),         # folded W2 (resident)
                pl.BlockSpec((C_out, 1), lambda i, j: (0, 0)),         # folded b2
            ],
            out_specs=pl.BlockSpec((None, C_out, tn), lambda i, j: (i, 0, j)),
        ),
        compiler_params=pltpu.CompilerParams(
            dimension_semantics=("parallel", "parallel"),
            # actual need + margin, never the full v7x 64 MiB/TC
            vmem_limit_bytes=int(min(48 << 20, max(16 << 20, 2 * need_bytes))),
        ),
        cost_estimate=pl.CostEstimate(flops=int(flops), transcendentals=0,
                                      bytes_accessed=int(bytes_accessed)),
    )(xm, w1f, b1, w2f, b2)

    if Np != N:
        # TODO(synk): a masked final-tile store would avoid this extra output
        # copy for non-multiple-of-128 N; kept as a plain slice for robustness.
        out = out[:, :, :N]
    return out.reshape(T, B, C_out, N)


# ----------------------------- references ------------------------------------

def _spike_ref(x):
    # Multispike forward: floor(clamp(x,0,4)+0.5)/4
    return jnp.floor(jnp.clip(x, 0.0, 4.0) + 0.5) * 0.25


def ms_mlp_reference(x, w1, bn1, w2, bn2, eps=1e-5):
    """Pure-JAX reference reproducing the PyTorch module (eval-mode BN)."""
    hi = jax.lax.Precision.HIGHEST

    def bn(h, p):
        s = p["gamma"] / jnp.sqrt(p["var"] + eps)
        b = p["beta"] - p["mean"] * s
        return h * s[:, None] + b[:, None]

    h = _spike_ref(x)                                              # fc1_lif
    h = jnp.einsum("tbcn,hc->tbhn", h, w1, precision=hi)           # fc1_conv (k=1)
    h = bn(h, bn1)                                                 # fc1_bn
    h = _spike_ref(h)                                              # fc2_lif
    h = jnp.einsum("tbhn,ch->tbcn", h, w2, precision=hi)           # fc2_conv (k=1)
    return bn(h, bn2)                                              # fc2_bn


def ms_mlp_reference_folded(x, w1, bn1, w2, bn2, compute_dtype, eps=1e-5):
    """Reference using the SAME folding / dtype-cast weights as the kernel."""
    hi = jax.lax.Precision.HIGHEST
    s1 = bn1["gamma"] / jnp.sqrt(bn1["var"] + eps)
    s2 = bn2["gamma"] / jnp.sqrt(bn2["var"] + eps)
    w1f = (w1 * (0.25 * s1)[:, None]).astype(compute_dtype).astype(jnp.float32)
    w2f = (w2 * (0.25 * s2)[:, None]).astype(compute_dtype).astype(jnp.float32)
    b1 = bn1["beta"] - bn1["mean"] * s1 + 0.5
    b2 = bn2["beta"] - bn2["mean"] * s2
    xs = jnp.floor(jnp.clip(x.astype(jnp.float32), 0.0, 4.0) + 0.5)
    h = jnp.einsum("tbcn,hc->tbhn", xs, w1f, precision=hi) + b1[:, None]
    hs = jnp.clip(jnp.floor(h), 0.0, 4.0)
    return jnp.einsum("tbhn,ch->tbcn", hs, w2f, precision=hi) + b2[:, None]


def _check(out, ref, name, mean_tol=2e-4, frac_tol=5e-3, big=1e-2):
    # The spike nonlinearity is a step function, so tiny numerical differences
    # can flip a quantization bin at exact ties; require a tight mean error and
    # allow only a vanishing fraction of bin-flip outliers.
    err = jnp.abs(out.astype(jnp.float32) - ref.astype(jnp.float32))
    mean_err = float(jnp.mean(err))
    frac_big = float(jnp.mean((err > big).astype(jnp.float32)))
    assert mean_err < mean_tol, (name, "mean_err", mean_err)
    assert frac_big < frac_tol, (name, "outlier_frac", frac_big)


# ----------------------------- demo / test -----------------------------------

if __name__ == "__main__":
    # Small shapes consistent with the module: x is (T, B, C, N).
    T, B, C, N = 2, 2, 16, 256
    H = 32  # hidden_features

    key = jax.random.PRNGKey(0)
    (kx, kw1, kw2, kg1, kb1, km1, kv1, kg2, kb2, km2, kv2, kx2) = jax.random.split(key, 12)

    x = jax.random.normal(kx, (T, B, C, N), dtype=jnp.float32) * 2.0
    w1 = jax.random.normal(kw1, (H, C), dtype=jnp.float32) * (1.0 / jnp.sqrt(C))
    w2 = jax.random.normal(kw2, (C, H), dtype=jnp.float32) * (1.0 / jnp.sqrt(H))
    bn1 = dict(
        gamma=1.0 + 0.1 * jax.random.normal(kg1, (H,), jnp.float32),
        beta=0.1 * jax.random.normal(kb1, (H,), jnp.float32),
        mean=0.1 * jax.random.normal(km1, (H,), jnp.float32),
        var=jnp.abs(jax.random.normal(kv1, (H,), jnp.float32)) + 0.5,
    )
    bn2 = dict(
        gamma=1.0 + 0.1 * jax.random.normal(kg2, (C,), jnp.float32),
        beta=0.1 * jax.random.normal(kb2, (C,), jnp.float32),
        mean=0.1 * jax.random.normal(km2, (C,), jnp.float32),
        var=jnp.abs(jax.random.normal(kv2, (C,), jnp.float32)) + 0.5,
    )

    ref = jax.block_until_ready(ms_mlp_reference(x, w1, bn1, w2, bn2))

    # 0) validate the constant folding itself (pure JAX, f32, no kernel).
    folded_f32 = jax.block_until_ready(
        ms_mlp_reference_folded(x, w1, bn1, w2, bn2, jnp.float32))
    _check(folded_f32, ref, "fold-vs-module")

    # 1) default kernel path: bf16 MXU operands, f32 in / f32 out.
    out = jax.block_until_ready(ms_mlp_forward(x, w1, bn1, w2, bn2))
    assert out.shape == (T, B, C, N) and out.dtype == x.dtype, (out.shape, out.dtype)
    ref_bf16w = jax.block_until_ready(
        ms_mlp_reference_folded(x, w1, bn1, w2, bn2, jnp.bfloat16))
    _check(out, ref_bf16w, "kernel-bf16w-f32io")
    # loose end-to-end sanity against the unmodified module reference
    assert float(jnp.mean(jnp.abs(out - ref))) < 0.1

    # 2) bf16 I/O (halves HBM bytes for this HBM-bound kernel).
    xb = x.astype(jnp.bfloat16)
    out_b = jax.block_until_ready(ms_mlp_forward(xb, w1, bn1, w2, bn2))
    assert out_b.dtype == jnp.bfloat16, out_b.dtype
    ref_b = ms_mlp_reference_folded(xb, w1, bn1, w2, bn2, jnp.bfloat16)
    _check(out_b, ref_b.astype(jnp.bfloat16), "kernel-bf16-io")

    # 3) non-multiple-of-128 N exercises the padding / slice path.
    T2, B2, N2 = 1, 2, 100
    x2 = jax.random.normal(kx2, (T2, B2, C, N2), dtype=jnp.float32) * 2.0
    out2 = jax.block_until_ready(ms_mlp_forward(x2, w1, bn1, w2, bn2))
    assert out2.shape == (T2, B2, C, N2), out2.shape
    ref2 = jax.block_until_ready(
        ms_mlp_reference_folded(x2, w1, bn1, w2, bn2, jnp.bfloat16))
    _check(out2, ref2, "kernel-padded-N")

    print("KERNEL_OK")
</pallas_src>

<mosaic_0001>
module attributes {stable_mosaic.version = 11 : i64} {
  func.func @ms_mlp_kernel(%arg0: i32, %arg1: i32, %arg2: memref<1x16x256xf32, #tpu.memory_space<vmem>>, %arg3: memref<32x16xbf16, #tpu.memory_space<vmem>>, %arg4: memref<32x1xf32, #tpu.memory_space<vmem>>, %arg5: memref<16x32xbf16, #tpu.memory_space<vmem>>, %arg6: memref<16x1xf32, #tpu.memory_space<vmem>>, %arg7: memref<1x16x256xf32, #tpu.memory_space<vmem>>) attributes {dimension_semantics = [#tpu.dimension_semantics<parallel>, #tpu.dimension_semantics<parallel>], iteration_bounds = array<i64: 4, 1>, scalar_prefetch = 0 : i64, scratch_operands = 0 : i64, tpu.core_type = #tpu.core_type<tc>, window_params = [{transform_indices = @transform_0, window_bounds = array<i64: 1, 16, 256>}, {pipeline_mode = #tpu.pipeline_mode<synchronous>, transform_indices = @transform_1, window_bounds = array<i64: 32, 16>}, {pipeline_mode = #tpu.pipeline_mode<synchronous>, transform_indices = @transform_2, window_bounds = array<i64: 32, 1>}, {pipeline_mode = #tpu.pipeline_mode<synchronous>, transform_indices = @transform_3, window_bounds = array<i64: 16, 32>}, {pipeline_mode = #tpu.pipeline_mode<synchronous>, transform_indices = @transform_4, window_bounds = array<i64: 16, 1>}, {transform_indices = @transform_5, window_bounds = array<i64: 1, 16, 256>}]} {
    %c0 = arith.constant 0 : index
    %c0_0 = arith.constant 0 : index
    %c0_1 = arith.constant 0 : index
    %0 = vector.load %arg2[%c0, %c0_0, %c0_1] : memref<1x16x256xf32, #tpu.memory_space<vmem>>, vector<1x16x256xf32>
    %1 = vector.shape_cast %0 : vector<1x16x256xf32> to vector<16x256xf32>
    %cst = arith.constant 0.000000e+00 : f32
    %cst_2 = arith.constant 4.000000e+00 : f32
    %2 = vector.broadcast %cst : f32 to vector<16x256xf32>
    %3 = arith.maximumf %2, %1 : vector<16x256xf32>
    %4 = vector.broadcast %cst_2 : f32 to vector<16x256xf32>
    %5 = arith.minimumf %4, %3 : vector<16x256xf32>
    %cst_3 = arith.constant 5.000000e-01 : f32
    %6 = vector.broadcast %cst_3 : f32 to vector<16x256xf32>
    %7 = arith.addf %5, %6 : vector<16x256xf32>
    %8 = math.floor %7 : vector<16x256xf32>
    %9 = arith.truncf %8 : vector<16x256xf32> to vector<16x256xbf16>
    %c0_4 = arith.constant 0 : index
    %c0_5 = arith.constant 0 : index
    %10 = vector.load %arg3[%c0_4, %c0_5] : memref<32x16xbf16, #tpu.memory_space<vmem>>, vector<32x16xbf16>
    %cst_6 = arith.constant dense<0.000000e+00> : vector<32x256xf32>
    %11 = tpu.matmul %10, %9, %cst_6 {dimension_numbers = #tpu.dot_dimension_numbers<[1], [0], [0], [1], [0, 0, 1, 1], [], []>} : vector<32x16xbf16>, vector<16x256xbf16>, vector<32x256xf32> -> vector<32x256xf32>
    %c0_7 = arith.constant 0 : index
    %c0_8 = arith.constant 0 : index
    %12 = vector.load %arg4[%c0_7, %c0_8] : memref<32x1xf32, #tpu.memory_space<vmem>>, vector<32x1xf32>
    %13 = vector.broadcast %12 : vector<32x1xf32> to vector<32x256xf32>
    %14 = arith.addf %11, %13 : vector<32x256xf32>
    %15 = math.floor %14 : vector<32x256xf32>
    %cst_9 = arith.constant 0.000000e+00 : f32
    %cst_10 = arith.constant 4.000000e+00 : f32
    %16 = vector.broadcast %cst_9 : f32 to vector<32x256xf32>
    %17 = arith.maximumf %16, %15 : vector<32x256xf32>
    %18 = vector.broadcast %cst_10 : f32 to vector<32x256xf32>
    %19 = arith.minimumf %18, %17 : vector<32x256xf32>
    %20 = arith.truncf %19 : vector<32x256xf32> to vector<32x256xbf16>
    %c0_11 = arith.constant 0 : index
    %c0_12 = arith.constant 0 : index
    %21 = vector.load %arg5[%c0_11, %c0_12] : memref<16x32xbf16, #tpu.memory_space<vmem>>, vector<16x32xbf16>
    %cst_13 = arith.constant dense<0.000000e+00> : vector<16x256xf32>
    %22 = tpu.matmul %21, %20, %cst_13 {dimension_numbers = #tpu.dot_dimension_numbers<[1], [0], [0], [1], [0, 0, 1, 1], [], []>} : vector<16x32xbf16>, vector<32x256xbf16>, vector<16x256xf32> -> vector<16x256xf32>
    %c0_14 = arith.constant 0 : index
    %c0_15 = arith.constant 0 : index
    %23 = vector.load %arg6[%c0_14, %c0_15] : memref<16x1xf32, #tpu.memory_space<vmem>>, vector<16x1xf32>
    %24 = vector.broadcast %23 : vector<16x1xf32> to vector<16x256xf32>
    %25 = arith.addf %22, %24 : vector<16x256xf32>
    %c0_16 = arith.constant 0 : index
    %c0_17 = arith.constant 0 : index
    %c0_18 = arith.constant 0 : index
    %26 = vector.load %arg7[%c0_16, %c0_17, %c0_18] : memref<1x16x256xf32, #tpu.memory_space<vmem>>, vector<1x16x256xf32>
    %27 = vector.shape_cast %26 : vector<1x16x256xf32> to vector<16x256xf32>
    %28 = vector.shape_cast %25 : vector<16x256xf32> to vector<1x16x256xf32>
    tpu.vector_store %arg7[%c0_16, %c0_17, %c0_18], %28 {strides = array<i32>} : memref<1x16x256xf32, #tpu.memory_space<vmem>>, vector<1x16x256xf32>,
    return
  }
  func.func @transform_0(%arg0: i32, %arg1: i32) -> (i32, i32, i32) {
    %c0_i32 = arith.constant 0 : i32
    %c0_i32_0 = arith.constant 0 : i32
    return %arg0, %c0_i32, %arg1 : i32, i32, i32
  }
  func.func @transform_1(%arg0: i32, %arg1: i32) -> (i32, i32) {
    %c0_i32 = arith.constant 0 : i32
    %c0_i32_0 = arith.constant 0 : i32
    %c0_i32_1 = arith.constant 0 : i32
    return %c0_i32, %c0_i32_0 : i32, i32
  }
  func.func @transform_2(%arg0: i32, %arg1: i32) -> (i32, i32) {
    %c0_i32 = arith.constant 0 : i32
    %c0_i32_0 = arith.constant 0 : i32
    %c0_i32_1 = arith.constant 0 : i32
    return %c0_i32, %c0_i32_0 : i32, i32
  }
  func.func @transform_3(%arg0: i32, %arg1: i32) -> (i32, i32) {
    %c0_i32 = arith.constant 0 : i32
    %c0_i32_0 = arith.constant 0 : i32
    %c0_i32_1 = arith.constant 0 : i32
    return %c0_i32, %c0_i32_0 : i32, i32
  }
  func.func @transform_4(%arg0: i32, %arg1: i32) -> (i32, i32) {
    %c0_i32 = arith.constant 0 : i32
    %c0_i32_0 = arith.constant 0 : i32
    %c0_i32_1 = arith.constant 0 : i32
    return %c0_i32, %c0_i32_0 : i32, i32
  }
  func.func @transform_5(%arg0: i32, %arg1: i32) -> (i32, i32, i32) {
    %c0_i32 = arith.constant 0 : i32
    %c0_i32_0 = arith.constant 0 : i32
    return %arg0, %c0_i32, %arg1 : i32, i32, i32
  }
}

</mosaic_0001>

<llo_original>
// kernel: tpu_custom_call.1
$region0: #{tpu_custom_call.1}
  #allocation0 [shape = 'u32[]', space=smem, size = 0x4, offset = 0x4, fixed_abs, tag = 'smem constant byte address 0x4 - core index']
  #allocation1 [shape = 'u32[144,128]{1,0:T(1,128)}', space=vmem, size = 0x12000, scoped, tag = 'internal scratch']
  %s0 = inlined_call_operand.hbm [shape: f32[4,16,256], index: 0, kind: input, shape index: {}]
  %s1 = inlined_call_operand.vmem [shape: bf16[32,16], index: 1, kind: input, shape index: {}]
  %s2 = inlined_call_operand.vmem [shape: f32[32,1], index: 2, kind: input, shape index: {}]
  %s3 = inlined_call_operand.vmem [shape: bf16[16,32], index: 3, kind: input, shape index: {}]
  %s4 = inlined_call_operand.vmem [shape: f32[16,1], index: 4, kind: input, shape index: {}]
  %s5 = inlined_call_operand.hbm [shape: f32[4,16,256], index: 5, kind: output, shape index: {}]
  %s6 = sld [smem:[#allocation0]]
  $region57: #{tpu_custom_call.1} parent=0
    _
  %s8 = ssub.s32 1, %s6
  %s9 = scalar_select 0, %s8, %s6
  $region1: #{tpu_custom_call.1} parent=0
    #allocation2 [shape = 'u8[32768]{0}', space=vmem, size = 0x8000, scoped, tag = 'input window, operand 0']
    #allocation3 [shape = 's32[2]{0}', space=sflag, size = 0x8, scoped, tag = 'scoped memory for tpu_custom_call.1']
    #allocation4 [shape = 's32[2]{0}', space=sflag, size = 0x8, scoped, tag = 'scoped memory for tpu_custom_call.1']
    #allocation5 [shape = 'u8[32768]{0}', space=vmem, size = 0x8000, scoped, tag = 'output window, operand 0']
    %10 = vsyncpa [#allocation3], 0
    %s11 = scalar_lea.sflag [#allocation3], 1
    %12 = vsyncpa %s11, 0
    %13 = vsyncpa [#allocation4], 0
    %s14 = scalar_lea.sflag [#allocation4], 1
    %15 = vsyncpa %s14, 0
    loop: start=0, step=1, limit=6
    $region2: #{tpu_custom_call.1} parent=1 // loop_pre_header
      _
    $region3: #{tpu_custom_call.1} parent=1 // loop_header
      %s17 = sphi 0, %s21
      %p18 = scmp.ge.s32.totalorder %s17, 6
      %s24 = sphi 0, %s36
      %s25 = sphi 0, %s32
      %s26 = sphi 0, %s24
      %s27 = sphi 0, %s25
      %s28 = sphi 0, %s26
      %s29 = sphi 0, %s27
      %s41 = sphi 0, %s43
      %s44 = sphi 0, %s41
      %s45 = sphi 0, %s44
      %s61 = sphi 0, %s45
      %s65 = sphi 0, %s65
      %s67 = sphi 0, %s65
      %s68 = sphi 0, %s67
      %s82 = sphi 0, %s68
      %s86 = sphi 0, %s86
      %s88 = sphi 0, %s86
      %s89 = sphi 0, %s88
      %s103 = sphi 0, %s89
      %s107 = sphi 0, %s107
      %s109 = sphi 0, %s107
      %s110 = sphi 0, %s109
      %s124 = sphi 0, %s110
      %s128 = sphi 0, %s128
      %s130 = sphi 0, %s128
      %s131 = sphi 0, %s130
      %s145 = sphi 0, %s131
      %s153 = sphi 0, %s155
      %s156 = sphi 0, %s153
      %s157 = sphi 0, %s156
      %s173 = sphi 0, %s157
    $region4: #{tpu_custom_call.1} parent=1 // loop_header_branch
      %20 = sbr.rel (%p18) target = $region8
    $region5: #{tpu_custom_call.1} parent=1 // loop_body
      %s22 = ssub.s32 %s17, 1
      %s23 = ssub.s32 %s17, 2
      %s30 = sadd.s32 1, %s25
      %p31 = scmp.ge.s32.totalorder %s30, 1
      %s32 = scalar_select %p31, 0, %s30
      %s33 = sadd.s32 1, %s24
      %s34 = scalar_select %p31, %s33, %s24
      %p35 = scmp.ge.s32.totalorder %s34, 4
      %s36 = scalar_select %p35, 0, %s34
      %s37 = ssub.s32 %s24, %s36
      %s38 = ssub.s32 %s25, %s32
      %s39 = sor.u32 %s37, %s38
      %p40 = scmp.eq.s32.totalorder %s39, 0
      %s42 = sadd.s32 %s41, 1
      %s43 = scalar_select %p40, %s41, %s42
      %p46 = pneg %p40
      %p47 = scmp.eq.s32.totalorder %s17, 3
      %p48 = por %p46, %p47
      %p49 = scmp.ne.s32.totalorder %s41, %s44
      %p50 = scmp.eq.s32.totalorder %s17, 0
      %p51 = por %p49, %p50
      %p52 = scmp.ne.s32.totalorder %s41, %s44
      %p53 = scmp.eq.s32.totalorder %s22, 3
      %p54 = por %p52, %p53
      %p55 = scmp.ne.s32.totalorder %s44, %s45
      %p56 = scmp.eq.s32.totalorder %s22, 0
      %p57 = por %p55, %p56
      %p58 = scmp.ne.s32.totalorder %s44, %s45
      %p59 = scmp.eq.s32.totalorder %s23, 3
      %p60 = por %p58, %p59
      %p62 = scmp.ne.s32.totalorder %s45, %s61
      %p63 = scmp.eq.s32.totalorder %s23, 0
      %p64 = por %p62, %p63
      %s66 = sadd.s32 %s65, 1
      %p69 = scmp.eq.s32.totalorder %s17, 3
      %p70 = scmp.ne.s32.totalorder %s65, %s67
      %p71 = scmp.eq.s32.totalorder %s17, 0
      %p72 = por %p70, %p71
      %p73 = scmp.ne.s32.totalorder %s65, %s67
      %p74 = scmp.eq.s32.totalorder %s22, 3
      %p75 = por %p73, %p74
      %p76 = scmp.ne.s32.totalorder %s67, %s68
      %p77 = scmp.eq.s32.totalorder %s22, 0
      %p78 = por %p76, %p77
      %p79 = scmp.ne.s32.totalorder %s67, %s68
      %p80 = scmp.eq.s32.totalorder %s23, 3
      %p81 = por %p79, %p80
      %p83 = scmp.ne.s32.totalorder %s68, %s82
      %p84 = scmp.eq.s32.totalorder %s23, 0
      %p85 = por %p83, %p84
      %s87 = sadd.s32 %s86, 1
      %p90 = scmp.eq.s32.totalorder %s17, 3
      %p91 = scmp.ne.s32.totalorder %s86, %s88
      %p92 = scmp.eq.s32.totalorder %s17, 0
      %p93 = por %p91, %p92
      %p94 = scmp.ne.s32.totalorder %s86, %s88
      %p95 = scmp.eq.s32.totalorder %s22, 3
      %p96 = por %p94, %p95
      %p97 = scmp.ne.s32.totalorder %s88, %s89
      %p98 = scmp.eq.s32.totalorder %s22, 0
      %p99 = por %p97, %p98
      %p100 = scmp.ne.s32.totalorder %s88, %s89
      %p101 = scmp.eq.s32.totalorder %s23, 3
      %p102 = por %p100, %p101
      %p104 = scmp.ne.s32.totalorder %s89, %s103
      %p105 = scmp.eq.s32.totalorder %s23, 0
      %p106 = por %p104, %p105
      %s108 = sadd.s32 %s107, 1
      %p111 = scmp.eq.s32.totalorder %s17, 3
      %p112 = scmp.ne.s32.totalorder %s107, %s109
      %p113 = scmp.eq.s32.totalorder %s17, 0
      %p114 = por %p112, %p113
      %p115 = scmp.ne.s32.totalorder %s107, %s109
      %p116 = scmp.eq.s32.totalorder %s22, 3
      %p117 = por %p115, %p116
      %p118 = scmp.ne.s32.totalorder %s109, %s110
      %p119 = scmp.eq.s32.totalorder %s22, 0
      %p120 = por %p118, %p119
      %p121 = scmp.ne.s32.totalorder %s109, %s110
      %p122 = scmp.eq.s32.totalorder %s23, 3
      %p123 = por %p121, %p122
      %p125 = scmp.ne.s32.totalorder %s110, %s124
      %p126 = scmp.eq.s32.totalorder %s23, 0
      %p127 = por %p125, %p126
      %s129 = sadd.s32 %s128, 1
      %p132 = scmp.eq.s32.totalorder %s17, 3
      %p133 = scmp.ne.s32.totalorder %s128, %s130
      %p134 = scmp.eq.s32.totalorder %s17, 0
      %p135 = por %p133, %p134
      %p136 = scmp.ne.s32.totalorder %s128, %s130
      %p137 = scmp.eq.s32.totalorder %s22, 3
      %p138 = por %p136, %p137
      %p139 = scmp.ne.s32.totalorder %s130, %s131
      %p140 = scmp.eq.s32.totalorder %s22, 0
      %p141 = por %p139, %p140
      %p142 = scmp.ne.s32.totalorder %s130, %s131
      %p143 = scmp.eq.s32.totalorder %s23, 3
      %p144 = por %p142, %p143
      %p146 = scmp.ne.s32.totalorder %s131, %s145
      %p147 = scmp.eq.s32.totalorder %s23, 0
      %p148 = por %p146, %p147
      %s149 = ssub.s32 %s24, %s36
      %s150 = ssub.s32 %s25, %s32
      %s151 = sor.u32 %s149, %s150
      %p152 = scmp.eq.s32.totalorder %s151, 0
      %s154 = sadd.s32 %s153, 1
      %s155 = scalar_select %p152, %s153, %s154
      %p158 = pneg %p152
      %p159 = scmp.eq.s32.totalorder %s17, 3
      %p160 = por %p158, %p159
      %p161 = scmp.ne.s32.totalorder %s153, %s156
      %p162 = scmp.eq.s32.totalorder %s17, 0
      %p163 = por %p161, %p162
      %p164 = scmp.ne.s32.totalorder %s153, %s156
      %p165 = scmp.eq.s32.totalorder %s22, 3
      %p166 = por %p164, %p165
      %p167 = scmp.ne.s32.totalorder %s156, %s157
      %p168 = scmp.eq.s32.totalorder %s22, 0
      %p169 = por %p167, %p168
      %p170 = scmp.ne.s32.totalorder %s156, %s157
      %p171 = scmp.eq.s32.totalorder %s23, 3
      %p172 = por %p170, %p171
      %p174 = scmp.ne.s32.totalorder %s157, %s173
      %p175 = scmp.eq.s32.totalorder %s23, 0
      %p176 = por %p174, %p175
      %p177 = scmp.le.s32.totalorder 1, %s17
      %p178 = scmp.lt.s32.totalorder %s17, 5
      %p179 = pnand %p177, %p178
      %p180 = pneg %p179
      // Predicated region
      $region9: #{tpu_custom_call.1} parent=5 // pred_check
        _
      $region10: #{tpu_custom_call.1} parent=5 // pred_check_branch
        %182 = sbr.rel (%p179) target = $region12
      $region11: #{tpu_custom_call.1} parent=5 // pred_region
        %s183 = ssub.s32 %s17, 1
        // Predicated region
        $region13: #{tpu_custom_call.1} parent=11 // pred_check
          %p184 = pneg %p78
        $region14: #{tpu_custom_call.1} parent=11 // pred_check_branch
          %186 = sbr.rel (%p184) target = $region16
        $region15: #{tpu_custom_call.1} parent=11 // pred_region
          _
        $region16: #{tpu_custom_call.1} parent=11 // pred_fallthru
          _
        // Predicated region
        $region17: #{tpu_custom_call.1} parent=11 // pred_check
          %p187 = pneg %p99
        $region18: #{tpu_custom_call.1} parent=11 // pred_check_branch
          %189 = sbr.rel (%p187) target = $region20
        $region19: #{tpu_custom_call.1} parent=11 // pred_region
          _
        $region20: #{tpu_custom_call.1} parent=11 // pred_fallthru
          _
        // Predicated region
        $region21: #{tpu_custom_call.1} parent=11 // pred_check
          %p190 = pneg %p120
        $region22: #{tpu_custom_call.1} parent=11 // pred_check_branch
          %192 = sbr.rel (%p190) target = $region24
        $region23: #{tpu_custom_call.1} parent=11 // pred_region
          _
        $region24: #{tpu_custom_call.1} parent=11 // pred_fallthru
          _
        // Predicated region
        $region25: #{tpu_custom_call.1} parent=11 // pred_check
          %p193 = pneg %p141
        $region26: #{tpu_custom_call.1} parent=11 // pred_check_branch
          %195 = sbr.rel (%p193) target = $region28
        $region27: #{tpu_custom_call.1} parent=11 // pred_region
          _
        $region28: #{tpu_custom_call.1} parent=11 // pred_fallthru
          _
      $region12: #{tpu_custom_call.1} parent=5 // pred_fallthru
        _
      %p196 = scmp.lt.s32.totalorder %s17, 4
      // Predicated region
      $region29: #{tpu_custom_call.1} parent=5 // pred_check
        %p197 = pneg %p196
      $region30: #{tpu_custom_call.1} parent=5 // pred_check_branch
        %199 = sbr.rel (%p197) target = $region32
      $region31: #{tpu_custom_call.1} parent=5 // pred_region
        // Predicated region
        $region33: #{tpu_custom_call.1} parent=31 // pred_check
          %p200 = pneg %p51
        $region34: #{tpu_custom_call.1} parent=31 // pred_check_branch
          %202 = sbr.rel (%p200) target = $region36
        $region35: #{tpu_custom_call.1} parent=31 // pred_region
          %s203 = sand.u32 %s41, 1
          %s204 = scalar_lea.sflag [#allocation3], %s203
          %s205 = sand.u32 %s41, 1
          %s206 = smul.addr %s205, 32
          %s207 = scalar_lea.vmem [#allocation2], %s206
          %s208 = smul.u32 2, %s25
          %s210 = ssub.s32 512, 512
          %211 = vsyncadd %s204, %s210
          %s212 = smul.addr %s24, 4
          %s213 = sadd.s32 %s208, %s212
          %s214 = smul.addr %s213, 128
          %s215 = scalar_lea.hbm %s0, %s214
          %s216 = sshll.u32 %s207, 4
          %s217 = int_to_ptr.vmem [resolvable:$true] %s216
          %222 = dma.hbm_to_vmem [thread:$0]  %s215, 512, %s217, %s204, 256, 256, 16
        $region36: #{tpu_custom_call.1} parent=31 // pred_fallthru
          _
      $region32: #{tpu_custom_call.1} parent=5 // pred_fallthru
        _
      %p223 = scmp.le.s32.totalorder 1, %s17
      %p224 = scmp.lt.s32.totalorder %s17, 5
      %p225 = pnand %p223, %p224
      %p226 = pneg %p225
      // Predicated region
      $region37: #{tpu_custom_call.1} parent=5 // pred_check
        _
      $region38: #{tpu_custom_call.1} parent=5 // pred_check_branch
        %228 = sbr.rel (%p225) target = $region40
      $region39: #{tpu_custom_call.1} parent=5 // pred_region
        %s229 = ssub.s32 %s17, 1
        %s230 = sand.u32 %s44, 1
        %s231 = scalar_lea.sflag [#allocation3], %s230
        %s232 = sand.u32 %s44, 1
        %s233 = smul.addr %s232, 32
        %s234 = scalar_lea.vmem [#allocation2], %s233
        // Predicated region
        $region41: #{tpu_custom_call.1} parent=39 // pred_check
          %p235 = pneg %p57
        $region42: #{tpu_custom_call.1} parent=39 // pred_check_branch
          %237 = sbr.rel (%p235) target = $region44
        $region43: #{tpu_custom_call.1} parent=39 // pred_region
          %238 = dma.done %s231, 512
        $region44: #{tpu_custom_call.1} parent=39 // pred_fallthru
          _
        %s239 = sand.u32 %s44, 1
        %s240 = scalar_lea.sflag [#allocation3], %s239
        %s241 = sand.u32 %s44, 1
        %s242 = smul.addr %s241, 32
        %s243 = scalar_lea.vmem [#allocation2], %s242
        %p244 = pneg %p57
        %p245 = pneg %p54
        %p246 = pneg %p78
        %p247 = pneg %p75
        %p248 = pneg %p99
        %p249 = pneg %p96
        %p250 = pneg %p120
        %p251 = pneg %p117
        %p252 = pneg %p141
        %p253 = pneg %p138
        %p254 = pneg %p169
        %p255 = pneg %p166
        %s256 = sand.u32 %s156, 1
        %s257 = scalar_lea.sflag [#allocation4], %s256
        %s258 = sand.u32 %s156, 1
        %s259 = smul.addr %s258, 32
        %s260 = scalar_lea.vmem [#allocation5], %s259
        %s261 = smul.u32 2, %s27
        %s262 = smul.u32 2, %s27
        %v264 = vld [vmem:[%s234] sm:$0xff]
        %v265 = vld [vmem:[%s234 + $0x8] sm:$0xff]
        %v266 = vld [vmem:[%s234 + $0x10] sm:$0xff]
        %v267 = vld [vmem:[%s234 + $0x18] sm:$0xff]
        %v268 = vmax.f32 %v264, 0.0
        %v269 = vmax.f32 %v265, 0.0
        %v270 = vmax.f32 %v266, 0.0
        %v271 = vmax.f32 %v267, 0.0
        %v272 = vmin.f32 %v268, 4.0
        %v273 = vmin.f32 %v269, 4.0
        %v274 = vmin.f32 %v270, 4.0
        %v275 = vmin.f32 %v271, 4.0
        %v276 = vadd.f32 %v272, 0.5
        %v277 = vadd.f32 %v273, 0.5
        %v278 = vadd.f32 %v274, 0.5
        %v279 = vadd.f32 %v275, 0.5
        %v280 = vfloor.f32 %v276
        %v281 = vfloor.f32 %v277
        %v282 = vfloor.f32 %v278
        %v283 = vfloor.f32 %v279
        %v284 = vpack.c.bf16 %v282, %v280
        %v285 = vpack.c.bf16 %v283, %v281
        %v286 = vld [vmem:[%s1] sm:$0xf]
        %v287 = vld [vmem:[%s1 + $0x4] sm:$0xf]
        %v288 = vld [vmem:[%s1 + $0x8] sm:$0xf]
        %v289 = vld [vmem:[%s1 + $0xc] sm:$0xf]
        %v290 = vld [vmem:[%s2] sm:$0xff]
        %v291 = vld [vmem:[%s2 + $0x8] sm:$0xff]
        %v292 = vld [vmem:[%s2 + $0x10] sm:$0xff]
        %v293 = vld [vmem:[%s2 + $0x18] sm:$0xff]
        %295 = vset.pattern.permute.xlu0 0
        %296 = vperm.xlu0 %295, %v290
        %v297 = vpop.permute.xlu0 %296
        %300 = vset.pattern.permute.xlu0 0
        %301 = vperm.xlu0 %300, %v291
        %v302 = vpop.permute.xlu0 %301
        %305 = vset.pattern.permute.xlu0 0
        %306 = vperm.xlu0 %305, %v292
        %v307 = vpop.permute.xlu0 %306
        %310 = vset.pattern.permute.xlu0 0
        %311 = vperm.xlu0 %310, %v293
        %v312 = vpop.permute.xlu0 %311
        %v318 = vunpack.c.l.b16 %v286
        %v319 = vunpack.c.l.b16 %v287
        %v320 = vunpack.c.l.b16 %v288
        %v321 = vunpack.c.l.b16 %v289
        %v322 = vpack.c.b16 %v319, %v318
        %v323 = vpack.c.b16 %v321, %v320
        %vm324 = vcmask 130048
        %v326 = vsel %vm324, %v322, 0
        %v329 = vsel %vm324, %v323, 0
        %331 = vmatprep.subr.bf16.mxu0 %v285
        %332 = vmatpush1.bf16.msra.mxu0 %v284
        %333 = vmatprep.subr.bf16.mxu0 0
        %334 = vmatpush1.bf16.msra.mxu0 0
        %335 = vmatprep.subr.bf16.mxu0 0
        %336 = vmatpush1.bf16.msra.mxu0 0
        %337 = vmatprep.subr.bf16.mxu0 0
        %338 = vmatpush1.bf16.msra.mxu0 0
        %339 = vmatprep.subr.bf16.mxu0 0
        %340 = vmatpush1.bf16.msra.mxu0 0
        %341 = vmatprep.subr.bf16.mxu0 0
        %342 = vmatpush1.bf16.msra.mxu0 0
        %343 = vmatprep.subr.bf16.mxu0 0
        %344 = vmatpush1.bf16.msra.mxu0 0
        %345 = vmatprep.subr.bf16.mxu0 0
        %346 = vmatpush1.bf16.msra.mxu0 0
        %347 = vmatprep.subr.bf16.mxu0 0
        %348 = vmatpush1.bf16.msra.mxu0 0
        %349 = vmatprep.subr.bf16.mxu0 0
        %350 = vmatpush1.bf16.msra.mxu0 0
        %351 = vmatprep.subr.bf16.mxu0 0
        %352 = vmatpush1.bf16.msra.mxu0 0
        %353 = vmatprep.subr.bf16.mxu0 0
        %354 = vmatpush1.bf16.msra.mxu0 0
        %355 = vmatprep.subr.bf16.mxu0 0
        %356 = vmatpush1.bf16.msra.mxu0 0
        %357 = vmatprep.subr.bf16.mxu0 0
        %358 = vmatpush1.bf16.msra.mxu0 0
        %359 = vmatprep.subr.bf16.mxu0 0
        %360 = vmatpush1.bf16.msra.mxu0 0
        %361 = vmatprep.subr.bf16.mxu0 0
        %362 = vmatpush1.bf16.msra.mxu0 0
        %363 = vmatprep.mubr.bf16.mxu0 0
        %364 = vmatmul.mubr.bf16.gmra.mrb[0].mxu0 %v326
        %v365 = vpop.f32.mrb[0].mxu0
        %v366 = vadd.f32 %v297, %v365
        %v367 = vpop.f32.mrb[0].mxu0
        %v368 = vadd.f32 %v297, %v367
        %v369 = vpop.f32.mrb[0].mxu0
        %v370 = vadd.f32 %v302, %v369
        %v371 = vpop.f32.mrb[0].mxu0
        %v372 = vadd.f32 %v302, %v371
        %373 = vmatprep.mubr.bf16.mxu0 0
        %374 = vmatmul.mubr.bf16.gmra.mrb[0].mxu0 %v329
        %v375 = vpop.f32.mrb[0].mxu0
        %v376 = vadd.f32 %v307, %v375
        %v377 = vpop.f32.mrb[0].mxu0
        %v378 = vadd.f32 %v307, %v377
        %v379 = vpop.f32.mrb[0].mxu0
        %v380 = vadd.f32 %v312, %v379
        %v381 = vpop.f32.mrb[0].mxu0
        %v382 = vadd.f32 %v312, %v381
        %383 = vdwg.mxu0
        %v384 = vfloor.f32 %v366
        %v385 = vfloor.f32 %v368
        %v386 = vfloor.f32 %v370
        %v387 = vfloor.f32 %v372
        %v388 = vfloor.f32 %v376
        %v389 = vfloor.f32 %v378
        %v390 = vfloor.f32 %v380
        %v391 = vfloor.f32 %v382
        %v392 = vmax.f32 %v384, 0.0
        %v393 = vmax.f32 %v385, 0.0
        %v394 = vmax.f32 %v386, 0.0
        %v395 = vmax.f32 %v387, 0.0
        %v396 = vmax.f32 %v388, 0.0
        %v397 = vmax.f32 %v389, 0.0
        %v398 = vmax.f32 %v390, 0.0
        %v399 = vmax.f32 %v391, 0.0
        %v400 = vmin.f32 %v392, 4.0
        %v401 = vmin.f32 %v393, 4.0
        %v402 = vmin.f32 %v394, 4.0
        %v403 = vmin.f32 %v395, 4.0
        %v404 = vmin.f32 %v396, 4.0
        %v405 = vmin.f32 %v397, 4.0
        %v406 = vmin.f32 %v398, 4.0
        %v407 = vmin.f32 %v399, 4.0
        %v408 = vpack.c.bf16 %v402, %v400
        %v409 = vpack.c.bf16 %v403, %v401
        %v410 = vpack.c.bf16 %v406, %v404
        %v411 = vpack.c.bf16 %v407, %v405
        %v412 = vld [vmem:[%s3] sm:$0xf]
        %v413 = vld [vmem:[%s3 + $0x4] sm:$0xf]
        %v414 = vld [vmem:[%s4] sm:$0xff]
        %v415 = vld [vmem:[%s4 + $0x8] sm:$0xff]
        %417 = vset.pattern.permute.xlu0 0
        %418 = vperm.xlu0 %417, %v414
        %v419 = vpop.permute.xlu0 %418
        %422 = vset.pattern.permute.xlu0 0
        %423 = vperm.xlu0 %422, %v415
        %v424 = vpop.permute.xlu0 %423
        %v428 = vunpack.c.l.b16 %v412
        %v429 = vunpack.c.l.b16 %v413
        %v430 = vpack.c.b16 %v429, %v428
        %vm431 = vcmask 261120
        %v433 = vsel %vm431, %v430, 0
        %435 = vmatprep.subr.bf16.mxu0 %v409
        %436 = vmatpush1.bf16.msra.mxu0 %v408
        %437 = vmatprep.subr.bf16.mxu0 %v411
        %438 = vmatpush1.bf16.msra.mxu0 %v410
        %439 = vmatprep.subr.bf16.mxu0 0
        %440 = vmatpush1.bf16.msra.mxu0 0
        %441 = vmatprep.subr.bf16.mxu0 0
        %442 = vmatpush1.bf16.msra.mxu0 0
        %443 = vmatprep.subr.bf16.mxu0 0
        %444 = vmatpush1.bf16.msra.mxu0 0
        %445 = vmatprep.subr.bf16.mxu0 0
        %446 = vmatpush1.bf16.msra.mxu0 0
        %447 = vmatprep.subr.bf16.mxu0 0
        %448 = vmatpush1.bf16.msra.mxu0 0
        %449 = vmatprep.subr.bf16.mxu0 0
        %450 = vmatpush1.bf16.msra.mxu0 0
        %451 = vmatprep.subr.bf16.mxu0 0
        %452 = vmatpush1.bf16.msra.mxu0 0
        %453 = vmatprep.subr.bf16.mxu0 0
        %454 = vmatpush1.bf16.msra.mxu0 0
        %455 = vmatprep.subr.bf16.mxu0 0
        %456 = vmatpush1.bf16.msra.mxu0 0
        %457 = vmatprep.subr.bf16.mxu0 0
        %458 = vmatpush1.bf16.msra.mxu0 0
        %459 = vmatprep.subr.bf16.mxu0 0
        %460 = vmatpush1.bf16.msra.mxu0 0
        %461 = vmatprep.subr.bf16.mxu0 0
        %462 = vmatpush1.bf16.msra.mxu0 0
        %463 = vmatprep.subr.bf16.mxu0 0
        %464 = vmatpush1.bf16.msra.mxu0 0
        %465 = vmatprep.subr.bf16.mxu0 0
        %466 = vmatpush1.bf16.msra.mxu0 0
        %467 = vmatprep.mubr.bf16.mxu0 0
        %468 = vmatmul.mubr.bf16.gmra.mrb[0].mxu0 %v433
        %v469 = vpop.f32.mrb[0].mxu0
        %v470 = vadd.f32 %v419, %v469
        %v471 = vpop.f32.mrb[0].mxu0
        %v472 = vadd.f32 %v419, %v471
        %v473 = vpop.f32.mrb[0].mxu0
        %v474 = vadd.f32 %v424, %v473
        %v475 = vpop.f32.mrb[0].mxu0
        %v476 = vadd.f32 %v424, %v475
        %477 = vdwg.mxu0
        %478 = vst [vmem:[%s260] sm:$0xff] %v470
        %479 = vst [vmem:[%s260 + $0x8] sm:$0xff] %v472
        %480 = vst [vmem:[%s260 + $0x10] sm:$0xff] %v474
        %481 = vst [vmem:[%s260 + $0x18] sm:$0xff] %v476
        %s482 = sand.u32 %s156, 1
        %s483 = scalar_lea.sflag [#allocation4], %s482
        %s484 = sand.u32 %s156, 1
        %s485 = smul.addr %s484, 32
        %s486 = scalar_lea.vmem [#allocation5], %s485
        // Predicated region
        $region45: #{tpu_custom_call.1} parent=39 // pred_check
          %p487 = pneg %p166
        $region46: #{tpu_custom_call.1} parent=39 // pred_check_branch
          %489 = sbr.rel (%p487) target = $region48
        $region47: #{tpu_custom_call.1} parent=39 // pred_region
          %s490 = smul.u32 2, %s27
          %s492 = ssub.s32 512, 512
          %493 = vsyncadd %s483, %s492
          %s494 = smul.addr %s26, 4
          %s495 = sadd.s32 %s490, %s494
          %s496 = smul.addr %s495, 128
          %s497 = scalar_lea.hbm %s5, %s496
          %s498 = sshll.u32 %s486, 4
          %s499 = int_to_ptr.vmem [resolvable:$true] %s498
          %504 = dma.vmem_to_hbm [thread:$0]  %s499, 512, %s497, %s483, 256, 256, 16
        $region48: #{tpu_custom_call.1} parent=39 // pred_fallthru
          _
      $region40: #{tpu_custom_call.1} parent=5 // pred_fallthru
        _
      %p505 = scmp.le.s32.totalorder 2, %s17
      // Predicated region
      $region49: #{tpu_custom_call.1} parent=5 // pred_check
        %p506 = pneg %p505
      $region50: #{tpu_custom_call.1} parent=5 // pred_check_branch
        %508 = sbr.rel (%p506) target = $region52
      $region51: #{tpu_custom_call.1} parent=5 // pred_region
        %s509 = ssub.s32 %s17, 2
        // Predicated region
        $region53: #{tpu_custom_call.1} parent=51 // pred_check
          %p510 = pneg %p172
        $region54: #{tpu_custom_call.1} parent=51 // pred_check_branch
          %512 = sbr.rel (%p510) target = $region56
        $region55: #{tpu_custom_call.1} parent=51 // pred_region
          %s513 = sand.u32 %s157, 1
          %s514 = scalar_lea.sflag [#allocation4], %s513
          %s515 = sand.u32 %s157, 1
          %s516 = smul.addr %s515, 32
          %s517 = scalar_lea.vmem [#allocation5], %s516
          %518 = dma.done %s514, 512
        $region56: #{tpu_custom_call.1} parent=51 // pred_fallthru
          _
      $region52: #{tpu_custom_call.1} parent=5 // pred_fallthru
        _
    $region6: #{tpu_custom_call.1} parent=1 // loop_footer
      %s21 = sadd.s32 1, %s17
    $region7: #{tpu_custom_call.1} parent=1 // loop_footer_branch
      %16 = sbr.rel target = $region3
    $region8: #{tpu_custom_call.1} parent=1 // loop_exit
      _
    %519 = vsyncpa [#allocation3], 1
    %s520 = scalar_lea.sflag [#allocation3], 1
    %521 = vsyncpa %s520, 1
    %522 = vsyncpa [#allocation4], 1
    %s523 = scalar_lea.sflag [#allocation4], 1
    %524 = vsyncpa %s523, 1

</llo_original>
